<compile_context>
chip_gen: v5e
topology: v5e:2x2
jax: 0.10.0
libtpu: 0.0.40
codegen_flags: <defaults>
</compile_context>

<pallas_src>
import functools

import jax
import jax.numpy as jnp
import numpy as np
from jax import lax
from jax.experimental import pallas as pl
from jax.experimental.pallas import tpu as pltpu

_LANE = 128
_SUBLANE = 8


def _round_up(a, m):
    return (a + m - 1) // m * m


# --------------- fast path: batches of whole samples, VMEM-resident ---------------

def _ln_block_kernel(x_ref, w_ref, b_ref, o_ref, *, eps, inv_count, pad_cols):
    """One grid step == B whole samples.

    x_ref : (B, C, Pp)  Pp = H*W rounded up to a multiple of 128 (lane-dense)
    w_ref : (C, 1)      per-channel affine weight
    b_ref : (C, 1)      per-channel affine bias
    o_ref : (B, C, Pp)
    """
    x = x_ref[...].astype(jnp.float32)

    # Two-pass statistics (PyTorch-accurate). Lane-reduce first (keepdims),
    # then one sublane collapse -> per-sample (B,1,1) scalars.
    row = jnp.sum(x, axis=2, keepdims=True)                      # (B, C, 1)
    mean = jnp.sum(row, axis=1, keepdims=True) * inv_count       # (B, 1, 1)
    xc = x - mean
    rowc = jnp.sum(xc * xc, axis=2, keepdims=True)               # (B, C, 1)
    ssq = jnp.sum(rowc, axis=1, keepdims=True)                   # (B, 1, 1)
    if pad_cols:
        # Zero-padded spatial columns each contributed (0 - mean)^2; remove exactly.
        ssq = ssq - float(pad_cols) * (mean * mean)
    var = jnp.maximum(ssq * inv_count, 0.0)
    inv = lax.rsqrt(var + eps)                                   # (B, 1, 1), EUP

    # Fold normalization + affine into per-(sample, channel) scale/shift so the
    # output is a single x*scale+shift sweep. (C,1) broadcasts against (B,1,1).
    scale = w_ref[...] * inv                                     # (B, C, 1)
    shift = b_ref[...] - mean * scale                            # (B, C, 1)

    if x_ref.dtype == jnp.bfloat16:
        # v6e/v7x: keep the only heavy sweep in bf16 (halves vld/vst traffic);
        # statistics above stayed f32.
        o_ref[...] = (x_ref[...] * scale.astype(jnp.bfloat16)
                      + shift.astype(jnp.bfloat16)).astype(o_ref.dtype)
    else:
        o_ref[...] = (x * scale + shift).astype(o_ref.dtype)


# --------------- large-sample path: spatial tiling, two passes ---------------

def _ln_tiled_kernel(x_ref, w_ref, b_ref, o_ref, s1_ref, s2_ref, *,
                     eps, inv_count):
    """One sample per outer grid index; spatial axis tiled.

    grid = (N, 2, num_tiles):
      pass 0 (ps == 0): accumulate sum / sum-of-squares into VMEM scratch.
      pass 1 (ps == 1): fold stats + affine into scale/shift, write output.
    """
    ps = pl.program_id(1)
    pt = pl.program_id(2)

    @pl.when(jnp.logical_and(ps == 0, pt == 0))
    def _init():
        s1_ref[...] = jnp.zeros_like(s1_ref)
        s2_ref[...] = jnp.zeros_like(s2_ref)

    @pl.when(ps == 0)
    def _accumulate():
        x = x_ref[...].astype(jnp.float32)                       # (C, TP)
        s1_ref[...] += jnp.sum(x)
        s2_ref[...] += jnp.sum(x * x)

    @pl.when(ps == 1)
    def _emit():
        x = x_ref[...].astype(jnp.float32)
        mean = s1_ref[...] * inv_count                           # (1, 1)
        var = jnp.maximum(s2_ref[...] * inv_count - mean * mean, 0.0)
        inv = lax.rsqrt(var + eps)                               # (1, 1)
        scale = w_ref[...] * inv                                 # (C, 1)
        shift = b_ref[...] - mean * scale                        # (C, 1)
        o_ref[...] = (x * scale + shift).astype(o_ref.dtype)


# --------------------------------- wrapper ---------------------------------

def layer_norm(x, weight=None, bias=None, *, eps=1e-5,
               block_budget_bytes=16 * 1024 * 1024):
    """LayerNorm over x.shape[1:] with per-channel affine (DRIT LayerNorm).

    x      : (N, C, H, W)
    weight : (C,), (C,1,1) or None (None -> identity affine)
    bias   : (C,), (C,1,1) or None
    """
    N, C, H, W = x.shape
    P = H * W
    out_dtype = x.dtype

    if weight is None:
        weight = jnp.ones((C,), jnp.float32)
    if bias is None:
        bias = jnp.zeros((C,), jnp.float32)
    w2 = jnp.asarray(weight).reshape(C, 1).astype(jnp.float32)
    b2 = jnp.asarray(bias).reshape(C, 1).astype(jnp.float32)

    x3 = x.reshape(N, C, P)
    inv_count = 1.0 / float(C * P)

    x_item = jnp.dtype(x.dtype).itemsize
    o_item = jnp.dtype(out_dtype).itemsize
    p128 = _round_up(P, _LANE)          # lane-dense spatial axis
    c_rows = _round_up(C, _SUBLANE)     # VMEM sublane footprint of C
    # Per-element VMEM cost of one block: in + out (double-buffered by the
    # pipeline) plus ~3 f32-sized in-kernel temporaries.
    per_elem = 2 * x_item + 2 * o_item + 3 * 4
    per_sample_bytes = c_rows * p128 * per_elem

    if per_sample_bytes <= block_budget_bytes:
        # ---------------- fast path: whole samples VMEM-resident ----------------
        # Batch B samples per step to amortize the ~0.35us per-step cost, but
        # keep >= 2 grid steps where possible so both v7x TensorCores get work.
        b_max = max(1, block_budget_bytes // per_sample_bytes)
        bsz = int(max(1, min(b_max, -(-N // 2), N)))
        n_pad = _round_up(N, bsz)
        if n_pad != N or p128 != P:
            x3 = jnp.pad(x3, ((0, n_pad - N), (0, 0), (0, p128 - P)))
        kern = functools.partial(_ln_block_kernel, eps=float(eps),
                                 inv_count=inv_count,
                                 pad_cols=C * (p128 - P))
        vmem_limit = int(min(48 * 2**20,
                             max(16 * 2**20, 2 * bsz * per_sample_bytes)))
        out = pl.pallas_call(
            kern,
            out_shape=jax.ShapeDtypeStruct((n_pad, C, p128), out_dtype),
            grid=(n_pad // bsz,),
            in_specs=[
                pl.BlockSpec((bsz, C, p128), lambda g: (g, 0, 0)),
                pl.BlockSpec((C, 1), lambda g: (0, 0)),     # weight, resident
                pl.BlockSpec((C, 1), lambda g: (0, 0)),     # bias,   resident
            ],
            out_specs=pl.BlockSpec((bsz, C, p128), lambda g: (g, 0, 0)),
            compiler_params=pltpu.CompilerParams(
                dimension_semantics=("parallel",),
                vmem_limit_bytes=vmem_limit),
        )(x3, w2, b2)
        out = out[:N, :, :P]
    else:
        # --------- large-sample path: tile the spatial axis, two passes ---------
        tp = max(_LANE,
                 (block_budget_bytes // (c_rows * per_elem)) // _LANE * _LANE)
        tp = min(tp, p128)
        p_t = _round_up(P, tp)
        if p_t != P:
            x3 = jnp.pad(x3, ((0, 0), (0, 0), (0, p_t - P)))
        kern = functools.partial(_ln_tiled_kernel, eps=float(eps),
                                 inv_count=inv_count)
        vmem_limit = int(min(48 * 2**20,
                             max(16 * 2**20, 2 * c_rows * tp * per_elem)))
        out = pl.pallas_call(
            kern,
            out_shape=jax.ShapeDtypeStruct((N, C, p_t), out_dtype),
            grid=(N, 2, p_t // tp),
            in_specs=[
                pl.BlockSpec((None, C, tp), lambda n, s, t: (n, 0, t)),
                pl.BlockSpec((C, 1), lambda n, s, t: (0, 0)),
                pl.BlockSpec((C, 1), lambda n, s, t: (0, 0)),
            ],
            # During pass 0 the output block index is pinned to tile 0, so no
            # garbage tiles get written back to HBM; pass 1 walks the tiles.
            out_specs=pl.BlockSpec((None, C, tp), lambda n, s, t: (n, 0, t * s)),
            scratch_shapes=[pltpu.VMEM((1, 1), jnp.float32),
                            pltpu.VMEM((1, 1), jnp.float32)],
            compiler_params=pltpu.CompilerParams(
                dimension_semantics=("parallel", "arbitrary", "arbitrary"),
                vmem_limit_bytes=vmem_limit),
        )(x3, w2, b2)
        out = out[:, :, :P]

    return out.reshape(N, C, H, W)


# ---------------------- plain-JAX reference (check) ------------------------

def ref_layer_norm(x, weight, bias, *, eps=1e-5):
    mean = jnp.mean(x, axis=(1, 2, 3), keepdims=True)
    var = jnp.mean(jnp.square(x - mean), axis=(1, 2, 3), keepdims=True)
    y = (x - mean) / jnp.sqrt(var + eps)
    return y * weight[None, :, None, None] + bias[None, :, None, None]


# --------------------------------- main ------------------------------------

if __name__ == "__main__":
    key = jax.random.PRNGKey(0)
    kx, kw, kb, kx2 = jax.random.split(key, 4)

    N, C, H, W = 2, 4, 16, 16
    x = jax.random.normal(kx, (N, C, H, W), jnp.float32)
    w1 = 1.0 + 0.1 * jax.random.normal(kw, (C,), jnp.float32)
    b1 = 0.1 * jax.random.normal(kb, (C,), jnp.float32)

    # 1) Freshly-initialized module (weight=ones, bias=zeros), fast path.
    out0 = jax.block_until_ready(layer_norm(x))
    ref0 = ref_layer_norm(x, jnp.ones((C,), jnp.float32), jnp.zeros((C,), jnp.float32))
    np.testing.assert_allclose(np.asarray(out0), np.asarray(ref0),
                               rtol=1e-4, atol=1e-4)

    # 2) Non-trivial affine parameters, fast path.
    out1 = jax.block_until_ready(layer_norm(x, w1, b1))
    ref1 = ref_layer_norm(x, w1, b1)
    np.testing.assert_allclose(np.asarray(out1), np.asarray(ref1),
                               rtol=1e-4, atol=1e-4)

    # 3) Odd batch + non-128-multiple spatial size: exercises sample batching,
    #    batch padding, lane padding and the exact padding correction.
    x2 = jax.random.normal(kx2, (5, C, 10, 10), jnp.float32)
    out2 = jax.block_until_ready(layer_norm(x2, w1, b1))
    ref2 = ref_layer_norm(x2, w1, b1)
    np.testing.assert_allclose(np.asarray(out2), np.asarray(ref2),
                               rtol=1e-4, atol=1e-4)

    # 4) Force the spatially tiled (large-sample) path on the base shape by
    #    shrinking the VMEM budget: grid (N, 2 passes, 2 spatial tiles).
    out3 = jax.block_until_ready(layer_norm(x, w1, b1, block_budget_bytes=32 * 1024))
    np.testing.assert_allclose(np.asarray(out3), np.asarray(ref1),
                               rtol=1e-4, atol=1e-4)

    assert out1.shape == (N, C, H, W)
    assert bool(jnp.all(jnp.isfinite(out1)))

    print("KERNEL_OK")
</pallas_src>

<mosaic_0001>
module attributes {stable_mosaic.version = 11 : i64} {
  func.func @_ln_block_kernel(%arg0: i32, %arg1: memref<1x4x256xf32, #tpu.memory_space<vmem>>, %arg2: memref<4x1xf32, #tpu.memory_space<vmem>>, %arg3: memref<4x1xf32, #tpu.memory_space<vmem>>, %arg4: memref<1x4x256xf32, #tpu.memory_space<vmem>>) attributes {dimension_semantics = [#tpu.dimension_semantics<parallel>], iteration_bounds = array<i64: 2>, scalar_prefetch = 0 : i64, scratch_operands = 0 : i64, tpu.core_type = #tpu.core_type<tc>, window_params = [{transform_indices = @transform_0, window_bounds = array<i64: 1, 4, 256>}, {pipeline_mode = #tpu.pipeline_mode<synchronous>, transform_indices = @transform_1, window_bounds = array<i64: 4, 1>}, {pipeline_mode = #tpu.pipeline_mode<synchronous>, transform_indices = @transform_2, window_bounds = array<i64: 4, 1>}, {transform_indices = @transform_3, window_bounds = array<i64: 1, 4, 256>}]} {
    %c0 = arith.constant 0 : index
    %c0_0 = arith.constant 0 : index
    %c0_1 = arith.constant 0 : index
    %0 = vector.load %arg1[%c0, %c0_0, %c0_1] : memref<1x4x256xf32, #tpu.memory_space<vmem>>, vector<1x4x256xf32>
    %cst = arith.constant dense<0.000000e+00> : vector<1x4xf32>
    %1 = vector.multi_reduction <add>, %0, %cst [2] : vector<1x4x256xf32> to vector<1x4xf32>
    %2 = vector.shape_cast %1 : vector<1x4xf32> to vector<1x4x1xf32>
    %cst_2 = arith.constant dense<0.000000e+00> : vector<1x1xf32>
    %3 = vector.multi_reduction <add>, %2, %cst_2 [1] : vector<1x4x1xf32> to vector<1x1xf32>
    %4 = vector.shape_cast %3 : vector<1x1xf32> to vector<1x1x1xf32>
    %cst_3 = arith.constant 9.765625E-4 : f32
    %5 = vector.broadcast %cst_3 : f32 to vector<1x1x1xf32>
    %6 = arith.mulf %4, %5 : vector<1x1x1xf32>
    %7 = vector.broadcast %6 : vector<1x1x1xf32> to vector<1x4x256xf32>
    %8 = arith.subf %0, %7 : vector<1x4x256xf32>
    %9 = arith.mulf %8, %8 : vector<1x4x256xf32>
    %cst_4 = arith.constant dense<0.000000e+00> : vector<1x4xf32>
    %10 = vector.multi_reduction <add>, %9, %cst_4 [2] : vector<1x4x256xf32> to vector<1x4xf32>
    %11 = vector.shape_cast %10 : vector<1x4xf32> to vector<1x4x1xf32>
    %cst_5 = arith.constant dense<0.000000e+00> : vector<1x1xf32>
    %12 = vector.multi_reduction <add>, %11, %cst_5 [1] : vector<1x4x1xf32> to vector<1x1xf32>
    %13 = vector.shape_cast %12 : vector<1x1xf32> to vector<1x1x1xf32>
    %cst_6 = arith.constant 9.765625E-4 : f32
    %14 = vector.broadcast %cst_6 : f32 to vector<1x1x1xf32>
    %15 = arith.mulf %13, %14 : vector<1x1x1xf32>
    %cst_7 = arith.constant 0.000000e+00 : f32
    %16 = vector.broadcast %cst_7 : f32 to vector<1x1x1xf32>
    %17 = arith.maximumf %15, %16 : vector<1x1x1xf32>
    %cst_8 = arith.constant 9.99999974E-6 : f32
    %18 = vector.broadcast %cst_8 : f32 to vector<1x1x1xf32>
    %19 = arith.addf %17, %18 : vector<1x1x1xf32>
    %20 = math.rsqrt %19 : vector<1x1x1xf32>
    %c0_9 = arith.constant 0 : index
    %c0_10 = arith.constant 0 : index
    %21 = vector.load %arg2[%c0_9, %c0_10] : memref<4x1xf32, #tpu.memory_space<vmem>>, vector<4x1xf32>
    %22 = vector.shape_cast %21 : vector<4x1xf32> to vector<1x4x1xf32>
    %23 = vector.broadcast %20 : vector<1x1x1xf32> to vector<1x4x1xf32>
    %24 = arith.mulf %22, %23 : vector<1x4x1xf32>
    %c0_11 = arith.constant 0 : index
    %c0_12 = arith.constant 0 : index
    %25 = vector.load %arg3[%c0_11, %c0_12] : memref<4x1xf32, #tpu.memory_space<vmem>>, vector<4x1xf32>
    %26 = vector.broadcast %6 : vector<1x1x1xf32> to vector<1x4x1xf32>
    %27 = arith.mulf %26, %24 : vector<1x4x1xf32>
    %28 = vector.shape_cast %25 : vector<4x1xf32> to vector<1x4x1xf32>
    %29 = arith.subf %28, %27 : vector<1x4x1xf32>
    %30 = vector.broadcast %24 : vector<1x4x1xf32> to vector<1x4x256xf32>
    %31 = arith.mulf %0, %30 : vector<1x4x256xf32>
    %32 = vector.broadcast %29 : vector<1x4x1xf32> to vector<1x4x256xf32>
    %33 = arith.addf %31, %32 : vector<1x4x256xf32>
    %c0_13 = arith.constant 0 : index
    %c0_14 = arith.constant 0 : index
    %c0_15 = arith.constant 0 : index
    %34 = vector.load %arg4[%c0_13, %c0_14, %c0_15] : memref<1x4x256xf32, #tpu.memory_space<vmem>>, vector<1x4x256xf32>
    tpu.vector_store %arg4[%c0_13, %c0_14, %c0_15], %33 {strides = array<i32>} : memref<1x4x256xf32, #tpu.memory_space<vmem>>, vector<1x4x256xf32>,
    return
  }
  func.func @transform_0(%arg0: i32) -> (i32, i32, i32) {
    %c0_i32 = arith.constant 0 : i32
    %c0_i32_0 = arith.constant 0 : i32
    %c0_i32_1 = arith.constant 0 : i32
    return %arg0, %c0_i32, %c0_i32_0 : i32, i32, i32
  }
  func.func @transform_1(%arg0: i32) -> (i32, i32) {
    %c0_i32 = arith.constant 0 : i32
    %c0_i32_0 = arith.constant 0 : i32
    %c0_i32_1 = arith.constant 0 : i32
    return %c0_i32, %c0_i32_0 : i32, i32
  }
  func.func @transform_2(%arg0: i32) -> (i32, i32) {
    %c0_i32 = arith.constant 0 : i32
    %c0_i32_0 = arith.constant 0 : i32
    %c0_i32_1 = arith.constant 0 : i32
    return %c0_i32, %c0_i32_0 : i32, i32
  }
  func.func @transform_3(%arg0: i32) -> (i32, i32, i32) {
    %c0_i32 = arith.constant 0 : i32
    %c0_i32_0 = arith.constant 0 : i32
    %c0_i32_1 = arith.constant 0 : i32
    return %arg0, %c0_i32, %c0_i32_0 : i32, i32, i32
  }
}

</mosaic_0001>

<llo_original>
// kernel: tpu_custom_call.1
$region0: #{tpu_custom_call.1}
  #allocation0 [shape = 'u32[]', space=smem, size = 0x4, offset = 0x4, fixed_abs, tag = 'smem constant byte address 0x4 - core index']
  #allocation1 [shape = 'u32[72,128]{1,0:T(1,128)}', space=vmem, size = 0x9000, scoped, tag = 'internal scratch']
  %s0 = inlined_call_operand.hbm [shape: f32[2,4,256], index: 0, kind: input, shape index: {}]
  %s1 = inlined_call_operand.vmem [shape: f32[4,1], index: 1, kind: input, shape index: {}]
  %s2 = inlined_call_operand.vmem [shape: f32[4,1], index: 2, kind: input, shape index: {}]
  %s3 = inlined_call_operand.hbm [shape: f32[2,4,256], index: 3, kind: output, shape index: {}]
  %s4 = sld [smem:[#allocation0]]
  $region49: #{tpu_custom_call.1} parent=0
    _
  %s6 = ssub.s32 1, %s4
  %s7 = scalar_select 0, %s6, %s4
  $region1: #{tpu_custom_call.1} parent=0
    #allocation2 [shape = 'u8[8192]{0}', space=vmem, size = 0x2000, scoped, tag = 'input window, operand 0']
    #allocation3 [shape = 's32[2]{0}', space=sflag, size = 0x8, scoped, tag = 'scoped memory for tpu_custom_call.1']
    #allocation4 [shape = 's32[2]{0}', space=sflag, size = 0x8, scoped, tag = 'scoped memory for tpu_custom_call.1']
    #allocation5 [shape = 'u8[8192]{0}', space=vmem, size = 0x2000, scoped, tag = 'output window, operand 0']
    %8 = vsyncpa [#allocation3], 0
    %s9 = scalar_lea.sflag [#allocation3], 1
    %10 = vsyncpa %s9, 0
    %11 = vsyncpa [#allocation4], 0
    %s12 = scalar_lea.sflag [#allocation4], 1
    %13 = vsyncpa %s12, 0
    loop: start=0, step=1, limit=4
    $region2: #{tpu_custom_call.1} parent=1 // loop_pre_header
      _
    $region3: #{tpu_custom_call.1} parent=1 // loop_header
      %s15 = sphi 0, %s19
      %p16 = scmp.ge.s32.totalorder %s15, 4
      %s25 = sphi 0, %s27
      %s28 = sphi 0, %s25
      %s29 = sphi 0, %s28
      %s45 = sphi 0, %s29
      %s49 = sphi 0, %s49
      %s51 = sphi 0, %s49
      %s52 = sphi 0, %s51
      %s66 = sphi 0, %s52
      %s70 = sphi 0, %s70
      %s72 = sphi 0, %s70
      %s73 = sphi 0, %s72
      %s87 = sphi 0, %s73
      %s93 = sphi 0, %s95
      %s96 = sphi 0, %s93
      %s97 = sphi 0, %s96
      %s113 = sphi 0, %s97
    $region4: #{tpu_custom_call.1} parent=1 // loop_header_branch
      %18 = sbr.rel (%p16) target = $region8
    $region5: #{tpu_custom_call.1} parent=1 // loop_body
      %s20 = ssub.s32 %s15, 1
      %s21 = ssub.s32 %s15, 2
      %s22 = sadd.s32 %s15, 1
      %s23 = ssub.s32 %s15, %s22
      %p24 = scmp.eq.s32.totalorder %s23, 0
      %s26 = sadd.s32 %s25, 1
      %s27 = scalar_select %p24, %s25, %s26
      %p30 = pneg %p24
      %p31 = scmp.eq.s32.totalorder %s15, 1
      %p32 = por %p30, %p31
      %p33 = scmp.ne.s32.totalorder %s25, %s28
      %p34 = scmp.eq.s32.totalorder %s15, 0
      %p35 = por %p33, %p34
      %p36 = scmp.ne.s32.totalorder %s25, %s28
      %p37 = scmp.eq.s32.totalorder %s20, 1
      %p38 = por %p36, %p37
      %p39 = scmp.ne.s32.totalorder %s28, %s29
      %p40 = scmp.eq.s32.totalorder %s20, 0
      %p41 = por %p39, %p40
      %p42 = scmp.ne.s32.totalorder %s28, %s29
      %p43 = scmp.eq.s32.totalorder %s21, 1
      %p44 = por %p42, %p43
      %p46 = scmp.ne.s32.totalorder %s29, %s45
      %p47 = scmp.eq.s32.totalorder %s21, 0
      %p48 = por %p46, %p47
      %s50 = sadd.s32 %s49, 1
      %p53 = scmp.eq.s32.totalorder %s15, 1
      %p54 = scmp.ne.s32.totalorder %s49, %s51
      %p55 = scmp.eq.s32.totalorder %s15, 0
      %p56 = por %p54, %p55
      %p57 = scmp.ne.s32.totalorder %s49, %s51
      %p58 = scmp.eq.s32.totalorder %s20, 1
      %p59 = por %p57, %p58
      %p60 = scmp.ne.s32.totalorder %s51, %s52
      %p61 = scmp.eq.s32.totalorder %s20, 0
      %p62 = por %p60, %p61
      %p63 = scmp.ne.s32.totalorder %s51, %s52
      %p64 = scmp.eq.s32.totalorder %s21, 1
      %p65 = por %p63, %p64
      %p67 = scmp.ne.s32.totalorder %s52, %s66
      %p68 = scmp.eq.s32.totalorder %s21, 0
      %p69 = por %p67, %p68
      %s71 = sadd.s32 %s70, 1
      %p74 = scmp.eq.s32.totalorder %s15, 1
      %p75 = scmp.ne.s32.totalorder %s70, %s72
      %p76 = scmp.eq.s32.totalorder %s15, 0
      %p77 = por %p75, %p76
      %p78 = scmp.ne.s32.totalorder %s70, %s72
      %p79 = scmp.eq.s32.totalorder %s20, 1
      %p80 = por %p78, %p79
      %p81 = scmp.ne.s32.totalorder %s72, %s73
      %p82 = scmp.eq.s32.totalorder %s20, 0
      %p83 = por %p81, %p82
      %p84 = scmp.ne.s32.totalorder %s72, %s73
      %p85 = scmp.eq.s32.totalorder %s21, 1
      %p86 = por %p84, %p85
      %p88 = scmp.ne.s32.totalorder %s73, %s87
      %p89 = scmp.eq.s32.totalorder %s21, 0
      %p90 = por %p88, %p89
      %s91 = ssub.s32 %s15, %s22
      %p92 = scmp.eq.s32.totalorder %s91, 0
      %s94 = sadd.s32 %s93, 1
      %s95 = scalar_select %p92, %s93, %s94
      %p98 = pneg %p92
      %p99 = scmp.eq.s32.totalorder %s15, 1
      %p100 = por %p98, %p99
      %p101 = scmp.ne.s32.totalorder %s93, %s96
      %p102 = scmp.eq.s32.totalorder %s15, 0
      %p103 = por %p101, %p102
      %p104 = scmp.ne.s32.totalorder %s93, %s96
      %p105 = scmp.eq.s32.totalorder %s20, 1
      %p106 = por %p104, %p105
      %p107 = scmp.ne.s32.totalorder %s96, %s97
      %p108 = scmp.eq.s32.totalorder %s20, 0
      %p109 = por %p107, %p108
      %p110 = scmp.ne.s32.totalorder %s96, %s97
      %p111 = scmp.eq.s32.totalorder %s21, 1
      %p112 = por %p110, %p111
      %p114 = scmp.ne.s32.totalorder %s97, %s113
      %p115 = scmp.eq.s32.totalorder %s21, 0
      %p116 = por %p114, %p115
      %p117 = scmp.le.s32.totalorder 1, %s15
      %p118 = scmp.lt.s32.totalorder %s15, 3
      %p119 = pnand %p117, %p118
      %p120 = pneg %p119
      // Predicated region
      $region9: #{tpu_custom_call.1} parent=5 // pred_check
        _
      $region10: #{tpu_custom_call.1} parent=5 // pred_check_branch
        %122 = sbr.rel (%p119) target = $region12
      $region11: #{tpu_custom_call.1} parent=5 // pred_region
        %s123 = ssub.s32 %s15, 1
        // Predicated region
        $region13: #{tpu_custom_call.1} parent=11 // pred_check
          %p124 = pneg %p62
        $region14: #{tpu_custom_call.1} parent=11 // pred_check_branch
          %126 = sbr.rel (%p124) target = $region16
        $region15: #{tpu_custom_call.1} parent=11 // pred_region
          _
        $region16: #{tpu_custom_call.1} parent=11 // pred_fallthru
          _
        // Predicated region
        $region17: #{tpu_custom_call.1} parent=11 // pred_check
          %p127 = pneg %p83
        $region18: #{tpu_custom_call.1} parent=11 // pred_check_branch
          %129 = sbr.rel (%p127) target = $region20
        $region19: #{tpu_custom_call.1} parent=11 // pred_region
          _
        $region20: #{tpu_custom_call.1} parent=11 // pred_fallthru
          _
      $region12: #{tpu_custom_call.1} parent=5 // pred_fallthru
        _
      %p130 = scmp.lt.s32.totalorder %s15, 2
      // Predicated region
      $region21: #{tpu_custom_call.1} parent=5 // pred_check
        %p131 = pneg %p130
      $region22: #{tpu_custom_call.1} parent=5 // pred_check_branch
        %133 = sbr.rel (%p131) target = $region24
      $region23: #{tpu_custom_call.1} parent=5 // pred_region
        // Predicated region
        $region25: #{tpu_custom_call.1} parent=23 // pred_check
          %p134 = pneg %p35
        $region26: #{tpu_custom_call.1} parent=23 // pred_check_branch
          %136 = sbr.rel (%p134) target = $region28
        $region27: #{tpu_custom_call.1} parent=23 // pred_region
          %s137 = sand.u32 %s25, 1
          %s138 = scalar_lea.sflag [#allocation3], %s137
          %s139 = sand.u32 %s25, 1
          %s140 = smul.addr %s139, 8
          %s141 = scalar_lea.vmem [#allocation2], %s140
          %143 = vsyncadd %s138, 0
          %s144 = smul.addr %s15, 2
          %s145 = smul.addr %s144, 4
          %s146 = scalar_lea.hbm %s0, %s145
          %s148 = sshll.u32 %s146, 4
          %s149 = int_to_ptr.hbm [resolvable:$true] %s148
          %s150 = sshll.u32 %s141, 4
          %s151 = int_to_ptr.vmem [resolvable:$true] %s150
          %153 = dma.hbm_to_vmem [thread:$0]  %s149, 128, %s151, %s138
        $region28: #{tpu_custom_call.1} parent=23 // pred_fallthru
          _
      $region24: #{tpu_custom_call.1} parent=5 // pred_fallthru
        _
      %p154 = scmp.le.s32.totalorder 1, %s15
      %p155 = scmp.lt.s32.totalorder %s15, 3
      %p156 = pnand %p154, %p155
      %p157 = pneg %p156
      // Predicated region
      $region29: #{tpu_custom_call.1} parent=5 // pred_check
        _
      $region30: #{tpu_custom_call.1} parent=5 // pred_check_branch
        %159 = sbr.rel (%p156) target = $region32
      $region31: #{tpu_custom_call.1} parent=5 // pred_region
        %s160 = ssub.s32 %s15, 1
        %s161 = sand.u32 %s28, 1
        %s162 = scalar_lea.sflag [#allocation3], %s161
        %s163 = sand.u32 %s28, 1
        %s164 = smul.addr %s163, 8
        %s165 = scalar_lea.vmem [#allocation2], %s164
        // Predicated region
        $region33: #{tpu_custom_call.1} parent=31 // pred_check
          %p166 = pneg %p41
        $region34: #{tpu_custom_call.1} parent=31 // pred_check_branch
          %168 = sbr.rel (%p166) target = $region36
        $region35: #{tpu_custom_call.1} parent=31 // pred_region
          %170 = dma.done %s162, 128
        $region36: #{tpu_custom_call.1} parent=31 // pred_fallthru
          _
        %s171 = sand.u32 %s28, 1
        %s172 = scalar_lea.sflag [#allocation3], %s171
        %s173 = sand.u32 %s28, 1
        %s174 = smul.addr %s173, 8
        %s175 = scalar_lea.vmem [#allocation2], %s174
        %p176 = pneg %p41
        %p177 = pneg %p38
        %p178 = pneg %p62
        %p179 = pneg %p59
        %p180 = pneg %p83
        %p181 = pneg %p80
        %p182 = pneg %p109
        %p183 = pneg %p106
        %s184 = sand.u32 %s96, 1
        %s185 = scalar_lea.sflag [#allocation4], %s184
        %s186 = sand.u32 %s96, 1
        %s187 = smul.addr %s186, 8
        %s188 = scalar_lea.vmem [#allocation5], %s187
        %v189 = vld [vmem:[%s165] sm:$0xff]
        %191 = vst [vmem:[#allocation1] ss:$2 sm:$0xff] %v189
        %v192 = vld.sshfl [vmem:[#allocation1] sm:$0xff pattern:$0x75316420]
        %v193 = vld.sshfl [vmem:[#allocation1 + $0x8] sm:$0xff pattern:$0x75316420]
        %vm196 = vcmask 1043456
        %v197 = vsel %vm196, %v192, 0.0
        %v198 = vsel %vm196, %v193, 0.0
        %v199 = vadd.f32 %v197, %v198
        %200 = vadd.xlane.f32.xlu0 %v199
        %v201 = vpop.xlane.xlu0 %200
        %v202 = vsel %vm196, %v201, 0.0
        %v203 = vrot.slane %v202, 4
        %v204 = vadd.f32 %v202, %v203
        %v205 = vrot.slane %v204, 2
        %v206 = vadd.f32 %v204, %v205
        %v207 = vrot.slane %v206, 1
        %v208 = vadd.f32 %v206, %v207
        %v209 = vmul.f32 %v208, 0.0009765625
        %v210 = vsub.f32 %v189, %v209
        %v211 = vmul.f32 %v210, %v210
        %213 = vst [vmem:[#allocation1] ss:$2 sm:$0xff] %v211
        %v214 = vld.sshfl [vmem:[#allocation1] sm:$0xff pattern:$0x75316420]
        %v215 = vld.sshfl [vmem:[#allocation1 + $0x8] sm:$0xff pattern:$0x75316420]
        %v218 = vsel %vm196, %v214, 0.0
        %v219 = vsel %vm196, %v215, 0.0
        %v220 = vadd.f32 %v218, %v219
        %221 = vadd.xlane.f32.xlu0 %v220
        %v222 = vpop.xlane.xlu0 %221
        %v223 = vsel %vm196, %v222, 0.0
        %v224 = vrot.slane %v223, 4
        %v225 = vadd.f32 %v223, %v224
        %v226 = vrot.slane %v225, 2
        %v227 = vadd.f32 %v225, %v226
        %v228 = vrot.slane %v227, 1
        %v229 = vadd.f32 %v227, %v228
        %v230 = vmul.f32 %v229, 0.0009765625
        %v231 = vmax.f32 %v230, 0.0
        %v232 = vadd.f32 %v231, 1e-05
        %v233 = vrsqrt.pop %v232
        %v234 = vmul.f32 %v233, %v232
        %v235 = vmul.f32 %v234, %v233
        %v236 = vmul.f32 0.5, %v235
        %v237 = vsub.f32 1.5, %v236
        %v238 = vmul.f32 %v233, %v237
        %vm239 = vweird.f32 %v232
        %vm240 = vweird.f32 %v233
        %vm241 = vmor %vm239, %vm240
        %v242 = vsel %vm241, %v233, %v238
        %v243 = vld [vmem:[%s1] sm:$0xf]
        %v244 = vmul.f32 %v243, %v242
        %v245 = vld [vmem:[%s2] sm:$0xf]
        %v246 = vmul.f32 %v209, %v244
        %v247 = vsub.f32 %v245, %v246
        %249 = vset.pattern.permute.xlu0 0
        %250 = vperm.xlu0 %249, %v244
        %v251 = vpop.permute.xlu0 %250
        %v253 = vunpack.c.l.s4 839922192
        %v254 = vunpack.c.0.s8 %v253
        %v255 = vperm.slane %v251, %v254
        %v257 = vmul.f32 %v189, %v255
        %259 = vset.pattern.permute.xlu0 0
        %260 = vperm.xlu0 %259, %v247
        %v261 = vpop.permute.xlu0 %260
        %v263 = vunpack.c.l.s4 839922192
        %v264 = vunpack.c.0.s8 %v263
        %v265 = vperm.slane %v261, %v264
        %v267 = vadd.f32 %v257, %v265
        %268 = vst [vmem:[%s188] sm:$0xff] %v267
        %s269 = sand.u32 %s96, 1
        %s270 = scalar_lea.sflag [#allocation4], %s269
        %s271 = sand.u32 %s96, 1
        %s272 = smul.addr %s271, 8
        %s273 = scalar_lea.vmem [#allocation5], %s272
        // Predicated region
        $region37: #{tpu_custom_call.1} parent=31 // pred_check
          %p274 = pneg %p106
        $region38: #{tpu_custom_call.1} parent=31 // pred_check_branch
          %276 = sbr.rel (%p274) target = $region40
        $region39: #{tpu_custom_call.1} parent=31 // pred_region
          %278 = vsyncadd %s270, 0
          %s279 = smul.addr %s20, 2
          %s280 = smul.addr %s279, 4
          %s281 = scalar_lea.hbm %s3, %s280
          %s283 = sshll.u32 %s273, 4
          %s284 = int_to_ptr.vmem [resolvable:$true] %s283
          %s285 = sshll.u32 %s281, 4
          %s286 = int_to_ptr.hbm [resolvable:$true] %s285
          %288 = dma.vmem_to_hbm [thread:$0]  %s284, 128, %s286, %s270
        $region40: #{tpu_custom_call.1} parent=31 // pred_fallthru
          _
      $region32: #{tpu_custom_call.1} parent=5 // pred_fallthru
        _
      %p289 = scmp.le.s32.totalorder 2, %s15
      // Predicated region
      $region41: #{tpu_custom_call.1} parent=5 // pred_check
        %p290 = pneg %p289
      $region42: #{tpu_custom_call.1} parent=5 // pred_check_branch
        %292 = sbr.rel (%p290) target = $region44
      $region43: #{tpu_custom_call.1} parent=5 // pred_region
        %s293 = ssub.s32 %s15, 2
        // Predicated region
        $region45: #{tpu_custom_call.1} parent=43 // pred_check
          %p294 = pneg %p112
        $region46: #{tpu_custom_call.1} parent=43 // pred_check_branch
          %296 = sbr.rel (%p294) target = $region48
        $region47: #{tpu_custom_call.1} parent=43 // pred_region
          %s297 = sand.u32 %s97, 1
          %s298 = scalar_lea.sflag [#allocation4], %s297
          %s299 = sand.u32 %s97, 1
          %s300 = smul.addr %s299, 8
          %s301 = scalar_lea.vmem [#allocation5], %s300
          %303 = dma.done %s298, 128
        $region48: #{tpu_custom_call.1} parent=43 // pred_fallthru
          _
      $region44: #{tpu_custom_call.1} parent=5 // pred_fallthru
        _
    $region6: #{tpu_custom_call.1} parent=1 // loop_footer
      %s19 = sadd.s32 1, %s15
    $region7: #{tpu_custom_call.1} parent=1 // loop_footer_branch
      %14 = sbr.rel target = $region3
    $region8: #{tpu_custom_call.1} parent=1 // loop_exit
      _
    %304 = vsyncpa [#allocation3], 1
    %s305 = scalar_lea.sflag [#allocation3], 1
    %306 = vsyncpa %s305, 1
    %307 = vsyncpa [#allocation4], 1
    %s308 = scalar_lea.sflag [#allocation4], 1
    %309 = vsyncpa %s308, 1

</llo_original>
